<compile_context>
chip_gen: v5e
topology: v5e:2x2
jax: 0.10.0
libtpu: 0.0.40
codegen_flags: <defaults>
</compile_context>

<pallas_src>
import functools

import jax
import jax.numpy as jnp
from jax.experimental import pallas as pl
from jax.experimental.pallas import tpu as pltpu


def _ffn_kernel(x_ref, w1_ref, b1_ref, w2_ref, b2_ref, o_ref, acc_ref):
    # x_ref : (tm, Dp)  bf16 row tile          (constant across k -> no re-DMA)
    # w1_ref: (Dp, tH)  bf16 W1 chunk          b1_ref: (1, tH) f32
    # w2_ref: (tH, Dp)  bf16 W2 chunk          b2_ref: (1, Dp) f32
    # o_ref : (tm, Dp)  output tile            acc_ref: (tm, Dp) f32 scratch
    k = pl.program_id(1)

    @pl.when(k == 0)
    def _():
        acc_ref[...] = jnp.zeros_like(acc_ref)

    # First linear chunk + bias + ReLU (f32 epilogue rides under MXU slack).
    h = jnp.dot(x_ref[...], w1_ref[...], preferred_element_type=jnp.float32)
    h = jnp.maximum(h + b1_ref[...], 0.0)

    # Dropout: identity in inference mode.

    # Second linear chunk, accumulate in f32.  (Precision choice: activations
    # are downcast to bf16 for the MXU, accumulation stays f32.)
    acc_ref[...] += jnp.dot(h.astype(w2_ref.dtype), w2_ref[...],
                            preferred_element_type=jnp.float32)

    @pl.when(k == pl.num_programs(1) - 1)
    def _():
        # b2 added exactly once, at the final H-chunk.
        o_ref[...] = (acc_ref[...] + b2_ref[...]).astype(o_ref.dtype)


def _round_up(x, m):
    return ((x + m - 1) // m) * m


def _pad_to(arr, shape):
    pads = [(0, t - s) for s, t in zip(arr.shape, shape)]
    if any(p[1] for p in pads):
        arr = jnp.pad(arr, pads)
    return arr


@functools.partial(jax.jit, static_argnames=("tm", "th", "compute_dtype"))
def positionwise_feed_forward(x, w1, b1, w2, b2, *, tm=256, th=512,
                              compute_dtype=jnp.bfloat16):
    """x: (B, T, D).  w1: (D, H), b1: (H,), w2: (H, D), b2: (D,)."""
    B, T, D = x.shape
    H = w1.shape[1]
    rows = B * T

    # Lane-dense padding (multiples of 128 on last dims; zero-pad is inert).
    Dp = _round_up(D, 128)
    Hp = _round_up(H, 128)

    # H-chunk: largest multiple of 128 <= th that divides Hp.
    tH = min(_round_up(th, 128), Hp)
    while Hp % tH:
        tH -= 128

    # Row tile: MXU-friendly (multiple of 8 sublanes; 256 default ~ MXU height).
    tm_eff = min(tm, _round_up(rows, 8))
    rows_p = _round_up(rows, tm_eff)

    cdt = jnp.dtype(compute_dtype)
    x2 = _pad_to(x.reshape(rows, D), (rows_p, Dp)).astype(cdt)
    w1p = _pad_to(w1, (Dp, Hp)).astype(cdt)
    b1p = _pad_to(b1.reshape(1, H), (1, Hp)).astype(jnp.float32)
    w2p = _pad_to(w2, (Hp, Dp)).astype(cdt)
    b2p = _pad_to(b2.reshape(1, D), (1, Dp)).astype(jnp.float32)

    grid = (rows_p // tm_eff, Hp // tH)

    # Advisory cost hint for the XLA scheduler around the custom call.
    flops = 4 * rows_p * Dp * Hp  # two matmuls, 2*M*K*N each
    bytes_accessed = (
        rows_p * Dp * cdt.itemsize            # x
        + Dp * Hp * cdt.itemsize              # W1
        + Hp * Dp * cdt.itemsize              # W2
        + (Hp + Dp) * 4                       # biases
        + rows_p * Dp * jnp.dtype(x.dtype).itemsize)  # out
    cost = pl.CostEstimate(flops=flops, transcendentals=0,
                           bytes_accessed=bytes_accessed)

    out2 = pl.pallas_call(
        _ffn_kernel,
        out_shape=jax.ShapeDtypeStruct((rows_p, Dp), x.dtype),
        grid_spec=pltpu.PrefetchScalarGridSpec(
            num_scalar_prefetch=0,
            grid=grid,
            in_specs=[
                pl.BlockSpec((tm_eff, Dp), lambda i, k: (i, 0)),  # x rows tile
                pl.BlockSpec((Dp, tH), lambda i, k: (0, k)),      # W1 chunk
                pl.BlockSpec((1, tH), lambda i, k: (0, k)),       # b1 chunk
                pl.BlockSpec((tH, Dp), lambda i, k: (k, 0)),      # W2 chunk
                pl.BlockSpec((1, Dp), lambda i, k: (0, 0)),       # b2
            ],
            out_specs=pl.BlockSpec((tm_eff, Dp), lambda i, k: (i, 0)),
            scratch_shapes=[pltpu.VMEM((tm_eff, Dp), jnp.float32)],
        ),
        compiler_params=pltpu.CompilerParams(
            dimension_semantics=("parallel", "arbitrary")),
        cost_estimate=cost,
    )(x2, w1p, b1p, w2p, b2p)

    return out2[:rows, :D].reshape(B, T, D)


def _init_params(key, idim, hidden_units, dtype=jnp.float32):
    """PyTorch-Linear-style init: U(-1/sqrt(fan_in), 1/sqrt(fan_in))."""
    k1, k2, k3, k4 = jax.random.split(key, 4)
    bound1 = 1.0 / (idim ** 0.5)
    bound2 = 1.0 / (hidden_units ** 0.5)
    # Stored transposed for row-major matmul: w1 is (idim, hidden).
    w1 = jax.random.uniform(k1, (idim, hidden_units), dtype, -bound1, bound1)
    b1 = jax.random.uniform(k2, (hidden_units,), dtype, -bound1, bound1)
    w2 = jax.random.uniform(k3, (hidden_units, idim), dtype, -bound2, bound2)
    b2 = jax.random.uniform(k4, (idim,), dtype, -bound2, bound2)
    return w1, b1, w2, b2


def _bf16_ref(x, w1, b1, w2, b2):
    """Pure-JAX reference mimicking the kernel's bf16-operand precision."""
    bf = lambda a: a.astype(jnp.bfloat16).astype(jnp.float32)
    h = jnp.maximum(bf(x) @ bf(w1) + b1, 0.0)
    return bf(h) @ bf(w2) + b2


if __name__ == "__main__":
    key = jax.random.PRNGKey(0)
    kx, kp, kx2, kp2 = jax.random.split(key, 4)

    # Small config consistent with the module (batch=2, seq=8, idim=32, hid=64).
    B, T, D, H = 2, 8, 32, 64
    x = jax.random.normal(kx, (B, T, D), jnp.float32)
    w1, b1, w2, b2 = _init_params(kp, D, H)

    out = positionwise_feed_forward(x, w1, b1, w2, b2)
    out = jax.block_until_ready(out)
    assert out.shape == (B, T, D)
    ref = _bf16_ref(x, w1, b1, w2, b2)
    assert jnp.allclose(out, ref, atol=2e-2, rtol=2e-2)

    # Second config exercising multiple row tiles and H-chunk accumulation.
    B2, T2, D2, H2 = 4, 96, 256, 1024
    x2 = jax.random.normal(kx2, (B2, T2, D2), jnp.float32)
    p2 = _init_params(kp2, D2, H2)
    out2 = positionwise_feed_forward(x2, *p2, tm=128, th=512)
    out2 = jax.block_until_ready(out2)
    ref2 = _bf16_ref(x2, *p2)
    assert out2.shape == (B2, T2, D2)
    assert jnp.allclose(out2, ref2, atol=5e-2, rtol=5e-2)

    print("KERNEL_OK")
</pallas_src>

<mosaic_0001>
module attributes {stable_mosaic.version = 11 : i64} {
  func.func @_ffn_kernel(%arg0: i32, %arg1: i32, %arg2: memref<16x128xbf16, #tpu.memory_space<vmem>>, %arg3: memref<128x128xbf16, #tpu.memory_space<vmem>>, %arg4: memref<1x128xf32, #tpu.memory_space<vmem>>, %arg5: memref<128x128xbf16, #tpu.memory_space<vmem>>, %arg6: memref<1x128xf32, #tpu.memory_space<vmem>>, %arg7: memref<16x128xf32, #tpu.memory_space<vmem>>, %arg8: memref<16x128xf32, #tpu.memory_space<vmem>>) attributes {dimension_semantics = [#tpu.dimension_semantics<parallel>, #tpu.dimension_semantics<arbitrary>], iteration_bounds = array<i64: 1, 1>, scalar_prefetch = 0 : i64, scratch_operands = 1 : i64, tpu.core_type = #tpu.core_type<tc>, window_params = [{transform_indices = @transform_0, window_bounds = array<i64: 16, 128>}, {transform_indices = @transform_1, window_bounds = array<i64: 128, 128>}, {transform_indices = @transform_2, window_bounds = array<i64: 1, 128>}, {transform_indices = @transform_3, window_bounds = array<i64: 128, 128>}, {pipeline_mode = #tpu.pipeline_mode<synchronous>, transform_indices = @transform_4, window_bounds = array<i64: 1, 128>}, {transform_indices = @transform_5, window_bounds = array<i64: 16, 128>}]} {
    %c0_i32 = arith.constant 0 : i32
    %0 = arith.cmpi eq, %arg1, %c0_i32 : i32
    %1 = arith.extui %0 : i1 to i32
    %c0_i32_0 = arith.constant 0 : i32
    %2 = arith.cmpi ne, %1, %c0_i32_0 : i32
    scf.if %2 {
      %cst_16 = arith.constant 0.000000e+00 : f32
      %20 = vector.broadcast %cst_16 : f32 to vector<16x128xf32>
      %c0_17 = arith.constant 0 : index
      %c0_18 = arith.constant 0 : index
      %21 = vector.load %arg8[%c0_17, %c0_18] : memref<16x128xf32, #tpu.memory_space<vmem>>, vector<16x128xf32>
      tpu.vector_store %arg8[%c0_17, %c0_18], %20 {strides = array<i32>} : memref<16x128xf32, #tpu.memory_space<vmem>>, vector<16x128xf32>,
    } else {
    }
    %c0 = arith.constant 0 : index
    %c0_1 = arith.constant 0 : index
    %3 = vector.load %arg2[%c0, %c0_1] : memref<16x128xbf16, #tpu.memory_space<vmem>>, vector<16x128xbf16>
    %c0_2 = arith.constant 0 : index
    %c0_3 = arith.constant 0 : index
    %4 = vector.load %arg3[%c0_2, %c0_3] : memref<128x128xbf16, #tpu.memory_space<vmem>>, vector<128x128xbf16>
    %cst = arith.constant dense<0.000000e+00> : vector<16x128xf32>
    %5 = tpu.matmul %3, %4, %cst {dimension_numbers = #tpu.dot_dimension_numbers<[1], [0], [0], [1], [0, 0, 1, 1], [], []>} : vector<16x128xbf16>, vector<128x128xbf16>, vector<16x128xf32> -> vector<16x128xf32>
    %c0_4 = arith.constant 0 : index
    %c0_5 = arith.constant 0 : index
    %6 = vector.load %arg4[%c0_4, %c0_5] : memref<1x128xf32, #tpu.memory_space<vmem>>, vector<1x128xf32>
    %7 = vector.broadcast %6 : vector<1x128xf32> to vector<16x128xf32>
    %8 = arith.addf %5, %7 : vector<16x128xf32>
    %cst_6 = arith.constant 0.000000e+00 : f32
    %9 = vector.broadcast %cst_6 : f32 to vector<16x128xf32>
    %10 = arith.maximumf %8, %9 : vector<16x128xf32>
    %c0_7 = arith.constant 0 : index
    %c0_8 = arith.constant 0 : index
    %11 = vector.load %arg8[%c0_7, %c0_8] : memref<16x128xf32, #tpu.memory_space<vmem>>, vector<16x128xf32>
    %12 = arith.truncf %10 : vector<16x128xf32> to vector<16x128xbf16>
    %c0_9 = arith.constant 0 : index
    %c0_10 = arith.constant 0 : index
    %13 = vector.load %arg5[%c0_9, %c0_10] : memref<128x128xbf16, #tpu.memory_space<vmem>>, vector<128x128xbf16>
    %cst_11 = arith.constant dense<0.000000e+00> : vector<16x128xf32>
    %14 = tpu.matmul %12, %13, %cst_11 {dimension_numbers = #tpu.dot_dimension_numbers<[1], [0], [0], [1], [0, 0, 1, 1], [], []>} : vector<16x128xbf16>, vector<128x128xbf16>, vector<16x128xf32> -> vector<16x128xf32>
    %15 = arith.addf %11, %14 : vector<16x128xf32>
    %c0_12 = arith.constant 0 : index
    %c0_13 = arith.constant 0 : index
    %16 = vector.load %arg8[%c0_12, %c0_13] : memref<16x128xf32, #tpu.memory_space<vmem>>, vector<16x128xf32>
    tpu.vector_store %arg8[%c0_12, %c0_13], %15 {strides = array<i32>} : memref<16x128xf32, #tpu.memory_space<vmem>>, vector<16x128xf32>,
    %c0_i32_14 = arith.constant 0 : i32
    %17 = arith.cmpi eq, %arg1, %c0_i32_14 : i32
    %18 = arith.extui %17 : i1 to i32
    %c0_i32_15 = arith.constant 0 : i32
    %19 = arith.cmpi ne, %18, %c0_i32_15 : i32
    scf.if %19 {
      %c0_16 = arith.constant 0 : index
      %c0_17 = arith.constant 0 : index
      %20 = vector.load %arg8[%c0_16, %c0_17] : memref<16x128xf32, #tpu.memory_space<vmem>>, vector<16x128xf32>
      %c0_18 = arith.constant 0 : index
      %c0_19 = arith.constant 0 : index
      %21 = vector.load %arg6[%c0_18, %c0_19] : memref<1x128xf32, #tpu.memory_space<vmem>>, vector<1x128xf32>
      %22 = vector.broadcast %21 : vector<1x128xf32> to vector<16x128xf32>
      %23 = arith.addf %20, %22 : vector<16x128xf32>
      %c0_20 = arith.constant 0 : index
      %c0_21 = arith.constant 0 : index
      %24 = vector.load %arg7[%c0_20, %c0_21] : memref<16x128xf32, #tpu.memory_space<vmem>>, vector<16x128xf32>
      tpu.vector_store %arg7[%c0_20, %c0_21], %23 {strides = array<i32>} : memref<16x128xf32, #tpu.memory_space<vmem>>, vector<16x128xf32>,
    } else {
    }
    return
  }
  func.func @transform_0(%arg0: i32, %arg1: i32) -> (i32, i32) {
    %c0_i32 = arith.constant 0 : i32
    %c0_i32_0 = arith.constant 0 : i32
    return %arg0, %c0_i32 : i32, i32
  }
  func.func @transform_1(%arg0: i32, %arg1: i32) -> (i32, i32) {
    %c0_i32 = arith.constant 0 : i32
    %c0_i32_0 = arith.constant 0 : i32
    return %c0_i32, %arg1 : i32, i32
  }
  func.func @transform_2(%arg0: i32, %arg1: i32) -> (i32, i32) {
    %c0_i32 = arith.constant 0 : i32
    %c0_i32_0 = arith.constant 0 : i32
    return %c0_i32, %arg1 : i32, i32
  }
  func.func @transform_3(%arg0: i32, %arg1: i32) -> (i32, i32) {
    %c0_i32 = arith.constant 0 : i32
    %c0_i32_0 = arith.constant 0 : i32
    return %arg1, %c0_i32 : i32, i32
  }
  func.func @transform_4(%arg0: i32, %arg1: i32) -> (i32, i32) {
    %c0_i32 = arith.constant 0 : i32
    %c0_i32_0 = arith.constant 0 : i32
    %c0_i32_1 = arith.constant 0 : i32
    return %c0_i32, %c0_i32_0 : i32, i32
  }
  func.func @transform_5(%arg0: i32, %arg1: i32) -> (i32, i32) {
    %c0_i32 = arith.constant 0 : i32
    %c0_i32_0 = arith.constant 0 : i32
    return %arg0, %c0_i32 : i32, i32
  }
}

</mosaic_0001>

<llo_original>
// kernel: positionwise_feed_forward.1
$region0: #{positionwise_feed_forward.1}
  #allocation0 [shape = 'u32[]', space=smem, size = 0x4, offset = 0x4, fixed_abs, tag = 'smem constant byte address 0x4 - core index']
  #allocation1 [shape = 'u32[72,128]{1,0:T(1,128)}', space=vmem, size = 0x9000, scoped, tag = 'internal scratch']
  #allocation2 [shape = 'f32[16,128]{1,0:T(8,128)}', space=vmem, size = 0x2000, scoped, tag = 'scratch operand']
  %s0 = inlined_call_operand.vmem [shape: bf16[16,128], index: 0, kind: input, shape index: {}]
  %s1 = inlined_call_operand.vmem [shape: bf16[128,128], index: 1, kind: input, shape index: {}]
  %s2 = inlined_call_operand.vmem [shape: f32[1,128], index: 2, kind: input, shape index: {}]
  %s3 = inlined_call_operand.vmem [shape: bf16[128,128], index: 3, kind: input, shape index: {}]
  %s4 = inlined_call_operand.vmem [shape: f32[1,128], index: 4, kind: input, shape index: {}]
  %s5 = inlined_call_operand.vmem [shape: f32[16,128], index: 5, kind: output, shape index: {}]
  %s6 = sld [smem:[#allocation0]]
  $region38: #{positionwise_feed_forward.1} parent=0
    _
  %s8 = ssub.s32 1, %s6
  %s9 = scalar_select 0, %s8, %s6
  // Predicated region
  $region2: #{positionwise_feed_forward.1} parent=0 // pred_check
    _
  $region3: #{positionwise_feed_forward.1} parent=0 // pred_check_branch
    %11 = sbr.rel (0) target = $region5
  $region4: #{positionwise_feed_forward.1} parent=0 // pred_region
    _
  $region5: #{positionwise_feed_forward.1} parent=0 // pred_fallthru
    _
  // Predicated region
  $region6: #{positionwise_feed_forward.1} parent=0 // pred_check
    _
  $region7: #{positionwise_feed_forward.1} parent=0 // pred_check_branch
    %13 = sbr.rel (0) target = $region9
  $region8: #{positionwise_feed_forward.1} parent=0 // pred_region
    _
  $region9: #{positionwise_feed_forward.1} parent=0 // pred_fallthru
    _
  // Predicated region
  $region10: #{positionwise_feed_forward.1} parent=0 // pred_check
    _
  $region11: #{positionwise_feed_forward.1} parent=0 // pred_check_branch
    %15 = sbr.rel (0) target = $region13
  $region12: #{positionwise_feed_forward.1} parent=0 // pred_region
    _
  $region13: #{positionwise_feed_forward.1} parent=0 // pred_fallthru
    _
  // Predicated region
  $region14: #{positionwise_feed_forward.1} parent=0 // pred_check
    _
  $region15: #{positionwise_feed_forward.1} parent=0 // pred_check_branch
    %17 = sbr.rel (0) target = $region17
  $region16: #{positionwise_feed_forward.1} parent=0 // pred_region
    _
  $region17: #{positionwise_feed_forward.1} parent=0 // pred_fallthru
    _
  // Predicated region
  $region18: #{positionwise_feed_forward.1} parent=0 // pred_check
    _
  $region19: #{positionwise_feed_forward.1} parent=0 // pred_check_branch
    %19 = sbr.rel (0) target = $region21
  $region20: #{positionwise_feed_forward.1} parent=0 // pred_region
    _
  $region21: #{positionwise_feed_forward.1} parent=0 // pred_fallthru
    _
  %p20 = scmp.eq.s32.totalorder 0, 0
  // Predicated region
  $region22: #{positionwise_feed_forward.1} parent=0 // pred_check
    %p21 = pneg %p20
  $region23: #{positionwise_feed_forward.1} parent=0 // pred_check_branch
    %23 = sbr.rel (%p21) target = $region25
  $region24: #{positionwise_feed_forward.1} parent=0 // pred_region
    %24 = vst [vmem:[#allocation2] sm:$0xff] 0.0
    %25 = vst [vmem:[#allocation2 + $0x8] sm:$0xff] 0.0
  $region25: #{positionwise_feed_forward.1} parent=0 // pred_fallthru
    _
  %v26 = vld [vmem:[%s0] sm:$0xf]
  %v27 = vld [vmem:[%s0 + $0x4] sm:$0xf]
  %v28 = vld [vmem:[%s1] sm:$0xf]
  %v29 = vld [vmem:[%s1 + $0x4] sm:$0xf]
  %v30 = vld [vmem:[%s1 + $0x8] sm:$0xf]
  %v31 = vld [vmem:[%s1 + $0xc] sm:$0xf]
  %v32 = vld [vmem:[%s1 + $0x10] sm:$0xf]
  %v33 = vld [vmem:[%s1 + $0x14] sm:$0xf]
  %v34 = vld [vmem:[%s1 + $0x18] sm:$0xf]
  %v35 = vld [vmem:[%s1 + $0x1c] sm:$0xf]
  %v36 = vld [vmem:[%s1 + $0x20] sm:$0xf]
  %v37 = vld [vmem:[%s1 + $0x24] sm:$0xf]
  %v38 = vld [vmem:[%s1 + $0x28] sm:$0xf]
  %v39 = vld [vmem:[%s1 + $0x2c] sm:$0xf]
  %v40 = vld [vmem:[%s1 + $0x30] sm:$0xf]
  %v41 = vld [vmem:[%s1 + $0x34] sm:$0xf]
  %v42 = vld [vmem:[%s1 + $0x38] sm:$0xf]
  %v43 = vld [vmem:[%s1 + $0x3c] sm:$0xf]
  %v44 = vld [vmem:[%s2] sm:$0x1]
  %v46 = vperm.slane %v44, 0
  %v50 = vunpack.c.l.b16 %v26
  %v51 = vunpack.c.l.b16 %v27
  %v52 = vpack.c.b16 %v51, %v50
  %v70 = vunpack.c.l.b16 %v28
  %v71 = vunpack.c.l.b16 %v29
  %v72 = vunpack.c.l.b16 %v30
  %v73 = vunpack.c.l.b16 %v31
  %v74 = vunpack.c.l.b16 %v32
  %v75 = vunpack.c.l.b16 %v33
  %v76 = vunpack.c.l.b16 %v34
  %v77 = vunpack.c.l.b16 %v35
  %v78 = vunpack.c.l.b16 %v36
  %v79 = vunpack.c.l.b16 %v37
  %v80 = vunpack.c.l.b16 %v38
  %v81 = vunpack.c.l.b16 %v39
  %v82 = vunpack.c.l.b16 %v40
  %v83 = vunpack.c.l.b16 %v41
  %v84 = vunpack.c.l.b16 %v42
  %v85 = vunpack.c.l.b16 %v43
  %v86 = vpack.c.b16 %v71, %v70
  %v87 = vpack.c.b16 %v73, %v72
  %v88 = vpack.c.b16 %v75, %v74
  %v89 = vpack.c.b16 %v77, %v76
  %v90 = vpack.c.b16 %v79, %v78
  %v91 = vpack.c.b16 %v81, %v80
  %v92 = vpack.c.b16 %v83, %v82
  %v93 = vpack.c.b16 %v85, %v84
  %102 = vmatpush.bf16.msra.mxu0 %v93
  %103 = vmatpush.bf16.msra.mxu0 %v92
  %104 = vmatpush.bf16.msra.mxu0 %v91
  %105 = vmatpush.bf16.msra.mxu0 %v90
  %106 = vmatpush.bf16.msra.mxu0 %v89
  %107 = vmatpush.bf16.msra.mxu0 %v88
  %108 = vmatpush.bf16.msra.mxu0 %v87
  %109 = vmatpush.bf16.msra.mxu0 %v86
  %110 = vmatmul.bf16.gmra.mxu0 %v52
  %v111 = vpop.f32.mrf.mxu0
  %v112 = vadd.f32 %v46, %v111
  %v113 = vpop.f32.mrf.mxu0
  %v114 = vadd.f32 %v46, %v113
  %115 = vdwg.mxu0
  %v116 = vmax.f32 %v112, 0.0
  %v117 = vmax.f32 %v114, 0.0
  %v118 = vld [vmem:[#allocation2] sm:$0xff]
  %v119 = vld [vmem:[#allocation2 + $0x8] sm:$0xff]
  %v120 = vpack.c.bf16 %v117, %v116
  %v121 = vld [vmem:[%s3] sm:$0xf]
  %v122 = vld [vmem:[%s3 + $0x4] sm:$0xf]
  %v123 = vld [vmem:[%s3 + $0x8] sm:$0xf]
  %v124 = vld [vmem:[%s3 + $0xc] sm:$0xf]
  %v125 = vld [vmem:[%s3 + $0x10] sm:$0xf]
  %v126 = vld [vmem:[%s3 + $0x14] sm:$0xf]
  %v127 = vld [vmem:[%s3 + $0x18] sm:$0xf]
  %v128 = vld [vmem:[%s3 + $0x1c] sm:$0xf]
  %v129 = vld [vmem:[%s3 + $0x20] sm:$0xf]
  %v130 = vld [vmem:[%s3 + $0x24] sm:$0xf]
  %v131 = vld [vmem:[%s3 + $0x28] sm:$0xf]
  %v132 = vld [vmem:[%s3 + $0x2c] sm:$0xf]
  %v133 = vld [vmem:[%s3 + $0x30] sm:$0xf]
  %v134 = vld [vmem:[%s3 + $0x34] sm:$0xf]
  %v135 = vld [vmem:[%s3 + $0x38] sm:$0xf]
  %v136 = vld [vmem:[%s3 + $0x3c] sm:$0xf]
  %v153 = vunpack.c.l.b16 %v121
  %v154 = vunpack.c.l.b16 %v122
  %v155 = vunpack.c.l.b16 %v123
  %v156 = vunpack.c.l.b16 %v124
  %v157 = vunpack.c.l.b16 %v125
  %v158 = vunpack.c.l.b16 %v126
  %v159 = vunpack.c.l.b16 %v127
  %v160 = vunpack.c.l.b16 %v128
  %v161 = vunpack.c.l.b16 %v129
  %v162 = vunpack.c.l.b16 %v130
  %v163 = vunpack.c.l.b16 %v131
  %v164 = vunpack.c.l.b16 %v132
  %v165 = vunpack.c.l.b16 %v133
  %v166 = vunpack.c.l.b16 %v134
  %v167 = vunpack.c.l.b16 %v135
  %v168 = vunpack.c.l.b16 %v136
  %v169 = vpack.c.b16 %v154, %v153
  %v170 = vpack.c.b16 %v156, %v155
  %v171 = vpack.c.b16 %v158, %v157
  %v172 = vpack.c.b16 %v160, %v159
  %v173 = vpack.c.b16 %v162, %v161
  %v174 = vpack.c.b16 %v164, %v163
  %v175 = vpack.c.b16 %v166, %v165
  %v176 = vpack.c.b16 %v168, %v167
  %185 = vmatpush.bf16.msra.mxu0 %v176
  %186 = vmatpush.bf16.msra.mxu0 %v175
  %187 = vmatpush.bf16.msra.mxu0 %v174
  %188 = vmatpush.bf16.msra.mxu0 %v173
  %189 = vmatpush.bf16.msra.mxu0 %v172
  %190 = vmatpush.bf16.msra.mxu0 %v171
  %191 = vmatpush.bf16.msra.mxu0 %v170
  %192 = vmatpush.bf16.msra.mxu0 %v169
  %193 = vmatmul.bf16.gmra.mxu0 %v120
  %v194 = vpop.f32.mrf.mxu0
  %v195 = vadd.f32 0.0, %v194
  %v196 = vpop.f32.mrf.mxu0
  %v197 = vadd.f32 0.0, %v196
  %198 = vdwg.mxu0
  %v199 = vadd.f32 %v118, %v195
  %v200 = vadd.f32 %v119, %v197
  %201 = vst [vmem:[#allocation2] sm:$0xff] %v199
  %202 = vst [vmem:[#allocation2 + $0x8] sm:$0xff] %v200
  // Predicated region
  $region26: #{positionwise_feed_forward.1} parent=0 // pred_check
    %p203 = pneg %p20
  $region27: #{positionwise_feed_forward.1} parent=0 // pred_check_branch
    %205 = sbr.rel (%p203) target = $region29
  $region28: #{positionwise_feed_forward.1} parent=0 // pred_region
    %v206 = vld [vmem:[#allocation2] sm:$0xff]
    %v207 = vld [vmem:[#allocation2 + $0x8] sm:$0xff]
    %v208 = vld [vmem:[%s4] sm:$0x1]
    %v210 = vperm.slane %v208, 0
    %v212 = vadd.f32 %v206, %v210
    %v213 = vadd.f32 %v207, %v210
    %214 = vst [vmem:[%s5] sm:$0xff] %v212
    %215 = vst [vmem:[%s5 + $0x8] sm:$0xff] %v213
  $region29: #{positionwise_feed_forward.1} parent=0 // pred_fallthru
    _
  // Predicated region
  $region30: #{positionwise_feed_forward.1} parent=0 // pred_check
    _
  $region31: #{positionwise_feed_forward.1} parent=0 // pred_check_branch
    %217 = sbr.rel (0) target = $region33
  $region32: #{positionwise_feed_forward.1} parent=0 // pred_region
    _
  $region33: #{positionwise_feed_forward.1} parent=0 // pred_fallthru
    _
  // Predicated region
  $region34: #{positionwise_feed_forward.1} parent=0 // pred_check
    _
  $region35: #{positionwise_feed_forward.1} parent=0 // pred_check_branch
    %219 = sbr.rel (0) target = $region37
  $region36: #{positionwise_feed_forward.1} parent=0 // pred_region
    _
  $region37: #{positionwise_feed_forward.1} parent=0 // pred_fallthru
    _

</llo_original>
